<compile_context>
chip_gen: v7x
topology: tpu7x:2x2x1
jax: 0.10.0
libtpu: 0.0.40
codegen_flags: <defaults>
</compile_context>

<pallas_src>
import jax
import jax.numpy as jnp
import numpy as np
from jax.experimental import pallas as pl
from jax.experimental.pallas import tpu as pltpu

_LANES = 128
_SUBLANES = 8


def _round_up(x, m):
    return -(-x // m) * m


def _vmem_limit_bytes():
    """Generation-aware scoped-VMEM limit (v5e/v6e: 96 of 128 MiB; v7x: 48 of 64 MiB)."""
    try:
        cap = int(pltpu.get_tpu_info().vmem_capacity_bytes)
    except Exception:
        cap = 64 << 20  # conservative (v7x-sized) fallback
    return max(16 << 20, min((cap * 3) // 4, 96 << 20))


def _choose_blocks(n, c, g, budget_bytes, x_itemsize):
    """Pick (BN samples, TG lane-groups of 128 pixels) per grid step.

    Accounts for double-buffered input/output pipeline copies, sublane padding
    and live compute temporaries (not just the nominal logits bytes).
    """

    def cost(bn, tg):
        tg_pad = _round_up(tg, _SUBLANES)
        slab_x = bn * tg_pad * _LANES * x_itemsize     # one class slab of logits
        slab_f = bn * tg_pad * _LANES * 4              # one f32/i32 (BN,TG,128) slab
        x_b = c * slab_x                               # logits block
        t_b = slab_f                                   # int32 targets block
        o_b = bn * _SUBLANES * _LANES * 4              # (BN,1,128) out, 8-sublane padded
        # 2x pipeline buffering on inputs + output, plus live compute values
        # (mx, s, tgt, t, a couple of class slabs).
        return 2 * (x_b + t_b + o_b) + (x_b + 6 * slab_f)

    if cost(1, g) <= budget_bytes:
        # A full sample row fits: keep TG = G and grow BN, but keep >= min(N,4)
        # sample-axis grid steps so megacore sharding / pipelining have work.
        tg = g
        steps = min(n, 4)
        bn_cap = max(1, n // steps)
        bn = max(1, min(bn_cap, budget_bytes // cost(1, g)))
    else:
        # Tile the pixel axis; TG is a multiple of 8 lane-groups (8*128 pixels).
        bn = 1
        tg = _SUBLANES
        while tg + _SUBLANES <= g and cost(1, tg + _SUBLANES) <= budget_bytes:
            tg += _SUBLANES
        tg = min(tg, g)
    return bn, tg


def _make_kernel(hw, needs_mask):
    def kernel(x_ref, t_ref, o_ref):
        # x_ref: (BN, C, TG, 128) logits; t_ref: (BN, TG, 128) int32 targets;
        # o_ref: (BN, 1, 128) f32 per-sample lane-partial loss sums, resident
        #        across the HW ("arbitrary") grid axis.
        j = pl.program_id(1)

        @pl.when(j == 0)
        def _init():
            o_ref[...] = jnp.zeros_like(o_ref)

        c = x_ref.shape[1]
        tg = t_ref.shape[1]
        t = t_ref[...]

        # Classes are separate slabs -> these reductions are elementwise VALU/EUP.
        x0 = x_ref[:, 0, :, :].astype(jnp.float32)
        mx = x0
        for k in range(1, c):
            mx = jnp.maximum(mx, x_ref[:, k, :, :].astype(jnp.float32))

        s = jnp.exp(x0 - mx)
        tgt = jnp.where(t == 0, x0, 0.0)
        for k in range(1, c):
            xk = x_ref[:, k, :, :].astype(jnp.float32)
            s = s + jnp.exp(xk - mx)
            tgt = tgt + jnp.where(t == k, xk, 0.0)

        loss = (mx + jnp.log(s)) - tgt            # (BN, TG, 128) per-pixel CE

        if needs_mask:  # static branch: zero padded / out-of-bounds pixels
            gi = jax.lax.broadcasted_iota(jnp.int32, loss.shape, 1)
            li = jax.lax.broadcasted_iota(jnp.int32, loss.shape, 2)
            pos = (j * tg + gi) * _LANES + li
            loss = jnp.where(pos < hw, loss, 0.0)

        o_ref[...] += jnp.sum(loss, axis=1, keepdims=True)

    return kernel


def sum_loss(predictions, targets):
    """predictions: (N, C, H, W) float logits (NCHW, like PyTorch).
    targets:     (N, H, W) integer class indices in [0, C).
    Returns a scalar float32 matching SumLossModule.forward."""
    N, C, H, W = predictions.shape
    HW = H * W
    G = _round_up(HW, _LANES) // _LANES
    HW_pad = G * _LANES

    x = predictions
    if x.dtype != jnp.bfloat16:
        x = x.astype(jnp.float32)
    x = x.reshape(N, C, HW)
    t = targets.reshape(N, HW).astype(jnp.int32)
    if HW_pad != HW:
        x = jnp.pad(x, ((0, 0), (0, 0), (0, HW_pad - HW)))
        t = jnp.pad(t, ((0, 0), (0, HW_pad - HW)))
    # Free row-major reshapes: pixels stay lane-dense, classes become slabs.
    x = x.reshape(N, C, G, _LANES)
    t = t.reshape(N, G, _LANES)

    vmem_limit = _vmem_limit_bytes()
    BN, TG = _choose_blocks(N, C, G, (vmem_limit * 7) // 10, x.dtype.itemsize)
    grid = (pl.cdiv(N, BN), pl.cdiv(G, TG))
    needs_mask = (HW_pad != HW) or (G % TG != 0)

    per_lane = pl.pallas_call(
        _make_kernel(HW, needs_mask),
        out_shape=jax.ShapeDtypeStruct((N, 1, _LANES), jnp.float32),
        grid_spec=pltpu.PrefetchScalarGridSpec(
            num_scalar_prefetch=0,
            grid=grid,
            in_specs=[
                pl.BlockSpec((BN, C, TG, _LANES), lambda i, j: (i, 0, j, 0)),
                pl.BlockSpec((BN, TG, _LANES), lambda i, j: (i, j, 0)),
            ],
            out_specs=pl.BlockSpec((BN, 1, _LANES), lambda i, j: (i, 0, 0)),
        ),
        compiler_params=pltpu.CompilerParams(
            dimension_semantics=("parallel", "arbitrary"),
            vmem_limit_bytes=vmem_limit,
        ),
    )(x, t)

    # Tiny finisher: lane-sum per sample, then logsumexp over N.
    per_sample = jnp.sum(per_lane[:, 0, :], axis=-1)
    return jax.nn.logsumexp(per_sample, axis=0)


def _reference(predictions, targets):
    # Pure-JAX reference: F.cross_entropy(reduction='none') -> sum(H,W) -> logsumexp(N).
    logits = jnp.transpose(predictions, (0, 2, 3, 1))  # (N, H, W, C)
    logz = jax.nn.logsumexp(logits, axis=-1)
    tgt = jnp.take_along_axis(logits, targets[..., None], axis=-1)[..., 0]
    per_px = logz - tgt                                # (N, H, W)
    per_sample = jnp.sum(per_px, axis=(1, 2))          # (N,)
    return jax.nn.logsumexp(per_sample, axis=0)


if __name__ == "__main__":
    key = jax.random.PRNGKey(0)
    k1, k2 = jax.random.split(key)

    N, C, H, W = 2, 4, 16, 16
    predictions = jax.random.normal(k1, (N, C, H, W), dtype=jnp.float32)
    targets = jax.random.randint(k2, (N, H, W), 0, C, dtype=jnp.int32)

    result = sum_loss(predictions, targets)
    jax.block_until_ready(result)

    ref = _reference(predictions, targets)
    assert np.allclose(np.asarray(result), np.asarray(ref), rtol=1e-4, atol=1e-4), (
        result, ref)
    print("KERNEL_OK")
</pallas_src>

<mosaic_0001>
module attributes {stable_mosaic.version = 11 : i64} {
  func.func @kernel(%arg0: i32, %arg1: i32, %arg2: memref<1x4x2x128xf32, #tpu.memory_space<vmem>>, %arg3: memref<1x2x128xi32, #tpu.memory_space<vmem>>, %arg4: memref<1x1x128xf32, #tpu.memory_space<vmem>>) attributes {dimension_semantics = [#tpu.dimension_semantics<parallel>, #tpu.dimension_semantics<arbitrary>], iteration_bounds = array<i64: 2, 1>, scalar_prefetch = 0 : i64, scratch_operands = 0 : i64, tpu.core_type = #tpu.core_type<tc>, window_params = [{transform_indices = @transform_0, window_bounds = array<i64: 1, 4, 2, 128>}, {transform_indices = @transform_1, window_bounds = array<i64: 1, 2, 128>}, {transform_indices = @transform_2, window_bounds = array<i64: 1, 1, 128>}]} {
    %c0_i32 = arith.constant 0 : i32
    %0 = arith.cmpi eq, %arg1, %c0_i32 : i32
    %1 = arith.extui %0 : i1 to i32
    %c0_i32_0 = arith.constant 0 : i32
    %2 = arith.cmpi ne, %1, %c0_i32_0 : i32
    scf.if %2 {
      %cst_39 = arith.constant 0.000000e+00 : f32
      %59 = vector.broadcast %cst_39 : f32 to vector<1x1x128xf32>
      %c0_40 = arith.constant 0 : index
      %c0_41 = arith.constant 0 : index
      %c0_42 = arith.constant 0 : index
      %60 = vector.load %arg4[%c0_40, %c0_41, %c0_42] : memref<1x1x128xf32, #tpu.memory_space<vmem>>, vector<1x1x128xf32>
      tpu.vector_store %arg4[%c0_40, %c0_41, %c0_42], %59 {strides = array<i32>} : memref<1x1x128xf32, #tpu.memory_space<vmem>>, vector<1x1x128xf32>,
    } else {
    }
    %c0 = arith.constant 0 : index
    %c0_1 = arith.constant 0 : index
    %c0_2 = arith.constant 0 : index
    %3 = vector.load %arg3[%c0, %c0_1, %c0_2] : memref<1x2x128xi32, #tpu.memory_space<vmem>>, vector<1x2x128xi32>
    %c0_3 = arith.constant 0 : index
    %c0_4 = arith.constant 0 : index
    %c0_5 = arith.constant 0 : index
    %c0_6 = arith.constant 0 : index
    %4 = vector.load %arg2[%c0_3, %c0_4, %c0_5, %c0_6] : memref<1x4x2x128xf32, #tpu.memory_space<vmem>>, vector<1x1x2x128xf32>
    %5 = vector.shape_cast %4 : vector<1x1x2x128xf32> to vector<1x2x128xf32>
    %c0_7 = arith.constant 0 : index
    %c1 = arith.constant 1 : index
    %c0_8 = arith.constant 0 : index
    %c0_9 = arith.constant 0 : index
    %6 = vector.load %arg2[%c0_7, %c1, %c0_8, %c0_9] : memref<1x4x2x128xf32, #tpu.memory_space<vmem>>, vector<1x1x2x128xf32>
    %7 = vector.shape_cast %6 : vector<1x1x2x128xf32> to vector<1x2x128xf32>
    %8 = arith.maximumf %5, %7 : vector<1x2x128xf32>
    %c0_10 = arith.constant 0 : index
    %c2 = arith.constant 2 : index
    %c0_11 = arith.constant 0 : index
    %c0_12 = arith.constant 0 : index
    %9 = vector.load %arg2[%c0_10, %c2, %c0_11, %c0_12] : memref<1x4x2x128xf32, #tpu.memory_space<vmem>>, vector<1x1x2x128xf32>
    %10 = vector.shape_cast %9 : vector<1x1x2x128xf32> to vector<1x2x128xf32>
    %11 = arith.maximumf %8, %10 : vector<1x2x128xf32>
    %c0_13 = arith.constant 0 : index
    %c3 = arith.constant 3 : index
    %c0_14 = arith.constant 0 : index
    %c0_15 = arith.constant 0 : index
    %12 = vector.load %arg2[%c0_13, %c3, %c0_14, %c0_15] : memref<1x4x2x128xf32, #tpu.memory_space<vmem>>, vector<1x1x2x128xf32>
    %13 = vector.shape_cast %12 : vector<1x1x2x128xf32> to vector<1x2x128xf32>
    %14 = arith.maximumf %11, %13 : vector<1x2x128xf32>
    %15 = arith.subf %5, %14 : vector<1x2x128xf32>
    %16 = math.exp %15 : vector<1x2x128xf32>
    %c0_i32_16 = arith.constant 0 : i32
    %17 = vector.broadcast %c0_i32_16 : i32 to vector<1x2x128xi32>
    %18 = arith.cmpi eq, %3, %17 : vector<1x2x128xi32>
    %cst = arith.constant 0.000000e+00 : f32
    %19 = vector.broadcast %cst : f32 to vector<1x2x128xf32>
    %20 = arith.select %18, %5, %19 : vector<1x2x128xi1>, vector<1x2x128xf32>
    %c0_17 = arith.constant 0 : index
    %c1_18 = arith.constant 1 : index
    %c0_19 = arith.constant 0 : index
    %c0_20 = arith.constant 0 : index
    %21 = vector.load %arg2[%c0_17, %c1_18, %c0_19, %c0_20] : memref<1x4x2x128xf32, #tpu.memory_space<vmem>>, vector<1x1x2x128xf32>
    %22 = vector.shape_cast %21 : vector<1x1x2x128xf32> to vector<1x2x128xf32>
    %23 = arith.subf %22, %14 : vector<1x2x128xf32>
    %24 = math.exp %23 : vector<1x2x128xf32>
    %25 = arith.addf %16, %24 : vector<1x2x128xf32>
    %c1_i32 = arith.constant 1 : i32
    %26 = vector.broadcast %c1_i32 : i32 to vector<1x2x128xi32>
    %27 = arith.cmpi eq, %3, %26 : vector<1x2x128xi32>
    %cst_21 = arith.constant 0.000000e+00 : f32
    %28 = vector.broadcast %cst_21 : f32 to vector<1x2x128xf32>
    %29 = arith.select %27, %22, %28 : vector<1x2x128xi1>, vector<1x2x128xf32>
    %30 = arith.addf %20, %29 : vector<1x2x128xf32>
    %c0_22 = arith.constant 0 : index
    %c2_23 = arith.constant 2 : index
    %c0_24 = arith.constant 0 : index
    %c0_25 = arith.constant 0 : index
    %31 = vector.load %arg2[%c0_22, %c2_23, %c0_24, %c0_25] : memref<1x4x2x128xf32, #tpu.memory_space<vmem>>, vector<1x1x2x128xf32>
    %32 = vector.shape_cast %31 : vector<1x1x2x128xf32> to vector<1x2x128xf32>
    %33 = arith.subf %32, %14 : vector<1x2x128xf32>
    %34 = math.exp %33 : vector<1x2x128xf32>
    %35 = arith.addf %25, %34 : vector<1x2x128xf32>
    %c2_i32 = arith.constant 2 : i32
    %36 = vector.broadcast %c2_i32 : i32 to vector<1x2x128xi32>
    %37 = arith.cmpi eq, %3, %36 : vector<1x2x128xi32>
    %cst_26 = arith.constant 0.000000e+00 : f32
    %38 = vector.broadcast %cst_26 : f32 to vector<1x2x128xf32>
    %39 = arith.select %37, %32, %38 : vector<1x2x128xi1>, vector<1x2x128xf32>
    %40 = arith.addf %30, %39 : vector<1x2x128xf32>
    %c0_27 = arith.constant 0 : index
    %c3_28 = arith.constant 3 : index
    %c0_29 = arith.constant 0 : index
    %c0_30 = arith.constant 0 : index
    %41 = vector.load %arg2[%c0_27, %c3_28, %c0_29, %c0_30] : memref<1x4x2x128xf32, #tpu.memory_space<vmem>>, vector<1x1x2x128xf32>
    %42 = vector.shape_cast %41 : vector<1x1x2x128xf32> to vector<1x2x128xf32>
    %43 = arith.subf %42, %14 : vector<1x2x128xf32>
    %44 = math.exp %43 : vector<1x2x128xf32>
    %45 = arith.addf %35, %44 : vector<1x2x128xf32>
    %c3_i32 = arith.constant 3 : i32
    %46 = vector.broadcast %c3_i32 : i32 to vector<1x2x128xi32>
    %47 = arith.cmpi eq, %3, %46 : vector<1x2x128xi32>
    %cst_31 = arith.constant 0.000000e+00 : f32
    %48 = vector.broadcast %cst_31 : f32 to vector<1x2x128xf32>
    %49 = arith.select %47, %42, %48 : vector<1x2x128xi1>, vector<1x2x128xf32>
    %50 = arith.addf %40, %49 : vector<1x2x128xf32>
    %51 = math.log %45 : vector<1x2x128xf32>
    %52 = arith.addf %14, %51 : vector<1x2x128xf32>
    %53 = arith.subf %52, %50 : vector<1x2x128xf32>
    %c0_32 = arith.constant 0 : index
    %c0_33 = arith.constant 0 : index
    %c0_34 = arith.constant 0 : index
    %54 = vector.load %arg4[%c0_32, %c0_33, %c0_34] : memref<1x1x128xf32, #tpu.memory_space<vmem>>, vector<1x1x128xf32>
    %cst_35 = arith.constant dense<0.000000e+00> : vector<1x128xf32>
    %55 = vector.multi_reduction <add>, %53, %cst_35 [1] : vector<1x2x128xf32> to vector<1x128xf32>
    %56 = vector.shape_cast %55 : vector<1x128xf32> to vector<1x1x128xf32>
    %57 = arith.addf %54, %56 : vector<1x1x128xf32>
    %c0_36 = arith.constant 0 : index
    %c0_37 = arith.constant 0 : index
    %c0_38 = arith.constant 0 : index
    %58 = vector.load %arg4[%c0_36, %c0_37, %c0_38] : memref<1x1x128xf32, #tpu.memory_space<vmem>>, vector<1x1x128xf32>
    tpu.vector_store %arg4[%c0_36, %c0_37, %c0_38], %57 {strides = array<i32>} : memref<1x1x128xf32, #tpu.memory_space<vmem>>, vector<1x1x128xf32>,
    return
  }
  func.func @transform_0(%arg0: i32, %arg1: i32) -> (i32, i32, i32, i32) {
    %c0_i32 = arith.constant 0 : i32
    %c0_i32_0 = arith.constant 0 : i32
    %c0_i32_1 = arith.constant 0 : i32
    return %arg0, %c0_i32, %arg1, %c0_i32_0 : i32, i32, i32, i32
  }
  func.func @transform_1(%arg0: i32, %arg1: i32) -> (i32, i32, i32) {
    %c0_i32 = arith.constant 0 : i32
    %c0_i32_0 = arith.constant 0 : i32
    return %arg0, %arg1, %c0_i32 : i32, i32, i32
  }
  func.func @transform_2(%arg0: i32, %arg1: i32) -> (i32, i32, i32) {
    %c0_i32 = arith.constant 0 : i32
    %c0_i32_0 = arith.constant 0 : i32
    %c0_i32_1 = arith.constant 0 : i32
    return %arg0, %c0_i32, %c0_i32_0 : i32, i32, i32
  }
}

</mosaic_0001>

<llo_original>
// kernel: tpu_custom_call.1
$region0: #{tpu_custom_call.1}
  #allocation0 [shape = 'u32[]', space=smem, size = 0x4, offset = 0x4, fixed_abs, tag = 'smem constant byte address 0x4 - core index']
  #allocation1 [shape = 'u32[144,128]{1,0:T(1,128)}', space=vmem, size = 0x12000, scoped, tag = 'internal scratch']
  %s0 = inlined_call_operand.hbm [shape: f32[2,4,2,128], index: 0, kind: input, shape index: {}]
  %s1 = inlined_call_operand.hbm [shape: s32[2,2,128], index: 1, kind: input, shape index: {}]
  %s2 = inlined_call_operand.hbm [shape: f32[2,1,128], index: 2, kind: output, shape index: {}]
  %s3 = sld [smem:[#allocation0]]
  $region53: #{tpu_custom_call.1} parent=0
    _
  %s5 = ssub.s32 1, %s3
  %s6 = scalar_select 0, %s5, %s3
  $region1: #{tpu_custom_call.1} parent=0
    #allocation2 [shape = 'u8[8192]{0}', space=vmem, size = 0x2000, scoped, tag = 'input window, operand 0']
    #allocation3 [shape = 's32[2]{0}', space=sflag, size = 0x8, scoped, tag = 'scoped memory for tpu_custom_call.1']
    #allocation4 [shape = 's32[2]{0}', space=sflag, size = 0x8, scoped, tag = 'scoped memory for tpu_custom_call.1']
    #allocation5 [shape = 'u8[2048]{0}', space=vmem, size = 0x800, scoped, tag = 'input window, operand 1']
    #allocation6 [shape = 's32[2]{0}', space=sflag, size = 0x8, scoped, tag = 'scoped memory for tpu_custom_call.1']
    #allocation7 [shape = 'u8[1024]{0}', space=vmem, size = 0x400, scoped, tag = 'output window, operand 0']
    %7 = vsyncpa [#allocation3], 0
    %s8 = scalar_lea.sflag [#allocation3], 1
    %9 = vsyncpa %s8, 0
    %10 = vsyncpa [#allocation6], 0
    %s11 = scalar_lea.sflag [#allocation6], 1
    %12 = vsyncpa %s11, 0
    %13 = vsyncpa [#allocation4], 0
    %s14 = scalar_lea.sflag [#allocation4], 1
    %15 = vsyncpa %s14, 0
    loop: start=0, step=1, limit=4
    $region2: #{tpu_custom_call.1} parent=1 // loop_pre_header
      _
    $region3: #{tpu_custom_call.1} parent=1 // loop_header
      %s17 = sphi 0, %s21
      %p18 = scmp.ge.s32.totalorder %s17, 4
      %s24 = sphi 0, %s36
      %s25 = sphi 0, %s32
      %s26 = sphi 0, %s24
      %s27 = sphi 0, %s25
      %s28 = sphi 0, %s26
      %s29 = sphi 0, %s27
      %s41 = sphi 0, %s43
      %s44 = sphi 0, %s41
      %s45 = sphi 0, %s44
      %s61 = sphi 0, %s45
      %s69 = sphi 0, %s71
      %s72 = sphi 0, %s69
      %s73 = sphi 0, %s72
      %s89 = sphi 0, %s73
      %s95 = sphi 0, %s97
      %s98 = sphi 0, %s95
      %s99 = sphi 0, %s98
      %s115 = sphi 0, %s99
    $region4: #{tpu_custom_call.1} parent=1 // loop_header_branch
      %20 = sbr.rel (%p18) target = $region8
    $region5: #{tpu_custom_call.1} parent=1 // loop_body
      %s22 = ssub.s32 %s17, 1
      %s23 = ssub.s32 %s17, 2
      %s30 = sadd.s32 1, %s25
      %p31 = scmp.ge.s32.totalorder %s30, 1
      %s32 = scalar_select %p31, 0, %s30
      %s33 = sadd.s32 1, %s24
      %s34 = scalar_select %p31, %s33, %s24
      %p35 = scmp.ge.s32.totalorder %s34, 2
      %s36 = scalar_select %p35, 0, %s34
      %s37 = ssub.s32 %s24, %s36
      %s38 = ssub.s32 %s25, %s32
      %s39 = sor.u32 %s37, %s38
      %p40 = scmp.eq.s32.totalorder %s39, 0
      %s42 = sadd.s32 %s41, 1
      %s43 = scalar_select %p40, %s41, %s42
      %p46 = pneg %p40
      %p47 = scmp.eq.s32.totalorder %s17, 1
      %p48 = por %p46, %p47
      %p49 = scmp.ne.s32.totalorder %s41, %s44
      %p50 = scmp.eq.s32.totalorder %s17, 0
      %p51 = por %p49, %p50
      %p52 = scmp.ne.s32.totalorder %s41, %s44
      %p53 = scmp.eq.s32.totalorder %s22, 1
      %p54 = por %p52, %p53
      %p55 = scmp.ne.s32.totalorder %s44, %s45
      %p56 = scmp.eq.s32.totalorder %s22, 0
      %p57 = por %p55, %p56
      %p58 = scmp.ne.s32.totalorder %s44, %s45
      %p59 = scmp.eq.s32.totalorder %s23, 1
      %p60 = por %p58, %p59
      %p62 = scmp.ne.s32.totalorder %s45, %s61
      %p63 = scmp.eq.s32.totalorder %s23, 0
      %p64 = por %p62, %p63
      %s65 = ssub.s32 %s24, %s36
      %s66 = ssub.s32 %s25, %s32
      %s67 = sor.u32 %s65, %s66
      %p68 = scmp.eq.s32.totalorder %s67, 0
      %s70 = sadd.s32 %s69, 1
      %s71 = scalar_select %p68, %s69, %s70
      %p74 = pneg %p68
      %p75 = scmp.eq.s32.totalorder %s17, 1
      %p76 = por %p74, %p75
      %p77 = scmp.ne.s32.totalorder %s69, %s72
      %p78 = scmp.eq.s32.totalorder %s17, 0
      %p79 = por %p77, %p78
      %p80 = scmp.ne.s32.totalorder %s69, %s72
      %p81 = scmp.eq.s32.totalorder %s22, 1
      %p82 = por %p80, %p81
      %p83 = scmp.ne.s32.totalorder %s72, %s73
      %p84 = scmp.eq.s32.totalorder %s22, 0
      %p85 = por %p83, %p84
      %p86 = scmp.ne.s32.totalorder %s72, %s73
      %p87 = scmp.eq.s32.totalorder %s23, 1
      %p88 = por %p86, %p87
      %p90 = scmp.ne.s32.totalorder %s73, %s89
      %p91 = scmp.eq.s32.totalorder %s23, 0
      %p92 = por %p90, %p91
      %s93 = ssub.s32 %s24, %s36
      %p94 = scmp.eq.s32.totalorder %s93, 0
      %s96 = sadd.s32 %s95, 1
      %s97 = scalar_select %p94, %s95, %s96
      %p100 = pneg %p94
      %p101 = scmp.eq.s32.totalorder %s17, 1
      %p102 = por %p100, %p101
      %p103 = scmp.ne.s32.totalorder %s95, %s98
      %p104 = scmp.eq.s32.totalorder %s17, 0
      %p105 = por %p103, %p104
      %p106 = scmp.ne.s32.totalorder %s95, %s98
      %p107 = scmp.eq.s32.totalorder %s22, 1
      %p108 = por %p106, %p107
      %p109 = scmp.ne.s32.totalorder %s98, %s99
      %p110 = scmp.eq.s32.totalorder %s22, 0
      %p111 = por %p109, %p110
      %p112 = scmp.ne.s32.totalorder %s98, %s99
      %p113 = scmp.eq.s32.totalorder %s23, 1
      %p114 = por %p112, %p113
      %p116 = scmp.ne.s32.totalorder %s99, %s115
      %p117 = scmp.eq.s32.totalorder %s23, 0
      %p118 = por %p116, %p117
      %p119 = scmp.le.s32.totalorder 1, %s17
      %p120 = scmp.lt.s32.totalorder %s17, 3
      %p121 = pnand %p119, %p120
      %p122 = pneg %p121
      // Predicated region
      $region9: #{tpu_custom_call.1} parent=5 // pred_check
        _
      $region10: #{tpu_custom_call.1} parent=5 // pred_check_branch
        %124 = sbr.rel (%p121) target = $region12
      $region11: #{tpu_custom_call.1} parent=5 // pred_region
        %s125 = ssub.s32 %s17, 1
      $region12: #{tpu_custom_call.1} parent=5 // pred_fallthru
        _
      %p126 = scmp.lt.s32.totalorder %s17, 2
      // Predicated region
      $region13: #{tpu_custom_call.1} parent=5 // pred_check
        %p127 = pneg %p126
      $region14: #{tpu_custom_call.1} parent=5 // pred_check_branch
        %129 = sbr.rel (%p127) target = $region16
      $region15: #{tpu_custom_call.1} parent=5 // pred_region
        // Predicated region
        $region17: #{tpu_custom_call.1} parent=15 // pred_check
          %p130 = pneg %p51
        $region18: #{tpu_custom_call.1} parent=15 // pred_check_branch
          %132 = sbr.rel (%p130) target = $region20
        $region19: #{tpu_custom_call.1} parent=15 // pred_region
          %s133 = sand.u32 %s41, 1
          %s134 = scalar_lea.sflag [#allocation3], %s133
          %s135 = sand.u32 %s41, 1
          %s136 = smul.addr %s135, 8
          %s137 = scalar_lea.vmem [#allocation2], %s136
          %s139 = ssub.s32 128, 128
          %140 = vsyncadd %s134, %s139
          %s141 = smul.addr %s24, 4
          %s142 = sadd.s32 %s25, %s141
          %s143 = smul.addr %s142, 32
          %s144 = scalar_lea.hbm %s0, %s143
          %s145 = sshll.u32 %s137, 4
          %s146 = int_to_ptr.vmem [resolvable:$true] %s145
          %151 = dma.hbm_to_vmem [thread:$0]  %s144, 128, %s146, %s134, 32, 32, 2
        $region20: #{tpu_custom_call.1} parent=15 // pred_fallthru
          _
        // Predicated region
        $region21: #{tpu_custom_call.1} parent=15 // pred_check
          %p152 = pneg %p79
        $region22: #{tpu_custom_call.1} parent=15 // pred_check_branch
          %154 = sbr.rel (%p152) target = $region24
        $region23: #{tpu_custom_call.1} parent=15 // pred_region
          %s155 = sand.u32 %s69, 1
          %s156 = scalar_lea.sflag [#allocation6], %s155
          %s157 = sand.u32 %s69, 1
          %s158 = smul.addr %s157, 2
          %s159 = scalar_lea.vmem [#allocation5], %s158
          %s161 = ssub.s32 32, 32
          %162 = vsyncadd %s156, %s161
          %s163 = sadd.s32 %s25, %s24
          %s164 = smul.addr %s163, 32
          %s165 = scalar_lea.hbm %s1, %s164
          %s167 = sshll.u32 %s159, 4
          %s168 = int_to_ptr.vmem [resolvable:$true] %s167
          %170 = dma.hbm_to_vmem [thread:$0]  %s165, 32, %s168, %s156
        $region24: #{tpu_custom_call.1} parent=15 // pred_fallthru
          _
      $region16: #{tpu_custom_call.1} parent=5 // pred_fallthru
        _
      %p171 = scmp.le.s32.totalorder 1, %s17
      %p172 = scmp.lt.s32.totalorder %s17, 3
      %p173 = pnand %p171, %p172
      %p174 = pneg %p173
      // Predicated region
      $region25: #{tpu_custom_call.1} parent=5 // pred_check
        _
      $region26: #{tpu_custom_call.1} parent=5 // pred_check_branch
        %176 = sbr.rel (%p173) target = $region28
      $region27: #{tpu_custom_call.1} parent=5 // pred_region
        %s177 = ssub.s32 %s17, 1
        %s178 = sand.u32 %s44, 1
        %s179 = scalar_lea.sflag [#allocation3], %s178
        %s180 = sand.u32 %s44, 1
        %s181 = smul.addr %s180, 8
        %s182 = scalar_lea.vmem [#allocation2], %s181
        // Predicated region
        $region29: #{tpu_custom_call.1} parent=27 // pred_check
          %p183 = pneg %p57
        $region30: #{tpu_custom_call.1} parent=27 // pred_check_branch
          %185 = sbr.rel (%p183) target = $region32
        $region31: #{tpu_custom_call.1} parent=27 // pred_region
          %186 = dma.done %s179, 128
        $region32: #{tpu_custom_call.1} parent=27 // pred_fallthru
          _
        %s187 = sand.u32 %s72, 1
        %s188 = scalar_lea.sflag [#allocation6], %s187
        %s189 = sand.u32 %s72, 1
        %s190 = smul.addr %s189, 2
        %s191 = scalar_lea.vmem [#allocation5], %s190
        // Predicated region
        $region33: #{tpu_custom_call.1} parent=27 // pred_check
          %p192 = pneg %p85
        $region34: #{tpu_custom_call.1} parent=27 // pred_check_branch
          %194 = sbr.rel (%p192) target = $region36
        $region35: #{tpu_custom_call.1} parent=27 // pred_region
          %195 = dma.done %s188, 32
        $region36: #{tpu_custom_call.1} parent=27 // pred_fallthru
          _
        %s196 = sand.u32 %s44, 1
        %s197 = scalar_lea.sflag [#allocation3], %s196
        %s198 = sand.u32 %s44, 1
        %s199 = smul.addr %s198, 8
        %s200 = scalar_lea.vmem [#allocation2], %s199
        %p201 = pneg %p57
        %p202 = pneg %p54
        %s203 = sand.u32 %s72, 1
        %s204 = scalar_lea.sflag [#allocation6], %s203
        %s205 = sand.u32 %s72, 1
        %s206 = smul.addr %s205, 2
        %s207 = scalar_lea.vmem [#allocation5], %s206
        %p208 = pneg %p85
        %p209 = pneg %p82
        %p210 = pneg %p111
        %p211 = pneg %p108
        %s212 = sand.u32 %s98, 1
        %s213 = scalar_lea.sflag [#allocation4], %s212
        %s214 = sand.u32 %s98, 1
        %s215 = scalar_lea.vmem [#allocation7], %s214
        %p216 = scmp.eq.s32.totalorder %s27, 0
        // Predicated region
        $region37: #{tpu_custom_call.1} parent=27 // pred_check
          %p217 = pneg %p216
        $region38: #{tpu_custom_call.1} parent=27 // pred_check_branch
          %219 = sbr.rel (%p217) target = $region40
        $region39: #{tpu_custom_call.1} parent=27 // pred_region
          %220 = vst [vmem:[%s215] sm:$0x1] 0.0
        $region40: #{tpu_custom_call.1} parent=27 // pred_fallthru
          _
        %v221 = vld [vmem:[%s191] sm:$0x3]
        %v222 = vld [vmem:[%s182] sm:$0x3]
        %s223 = scalar_lea.vmem %s182, 2 [#allocation2]
        %v224 = vld [vmem:[%s223] sm:$0x3]
        %v225 = vmax.f32 %v222, %v224
        %s226 = scalar_lea.vmem %s182, 4 [#allocation2]
        %v227 = vld [vmem:[%s226] sm:$0x3]
        %v228 = vmax.f32 %v225, %v227
        %s229 = scalar_lea.vmem %s182, 6 [#allocation2]
        %v230 = vld [vmem:[%s229] sm:$0x3]
        %v231 = vmax.f32 %v228, %v230
        %v232 = vsub.f32 %v222, %v231
        %v233 = vmul.f32 %v232, 1.442695
        %v234 = vpow.pop %v233
        %vm235 = vcmp.eq.s32.totalorder %v221, 0
        %v236 = vsel %vm235, %v222, 0.0
        %v237 = vsub.f32 %v224, %v231
        %v238 = vmul.f32 %v237, 1.442695
        %v239 = vpow.pop %v238
        %v240 = vadd.f32 %v234, %v239
        %vm241 = vcmp.eq.s32.totalorder %v221, 1
        %v242 = vsel %vm241, %v224, 0.0
        %v243 = vadd.f32 %v236, %v242
        %v244 = vsub.f32 %v227, %v231
        %v245 = vmul.f32 %v244, 1.442695
        %v246 = vpow.pop %v245
        %v247 = vadd.f32 %v240, %v246
        %vm248 = vcmp.eq.s32.totalorder %v221, 2
        %v249 = vsel %vm248, %v227, 0.0
        %v250 = vadd.f32 %v243, %v249
        %v251 = vsub.f32 %v230, %v231
        %v252 = vmul.f32 %v251, 1.442695
        %v253 = vpow.pop %v252
        %v254 = vadd.f32 %v247, %v253
        %vm255 = vcmp.eq.s32.totalorder %v221, 3
        %v256 = vsel %vm255, %v230, 0.0
        %v257 = vadd.f32 %v250, %v256
        %v258 = vlog2.pop %v254
        %v259 = vmul.f32 %v258, 0.6931472
        %v260 = vadd.f32 %v231, %v259
        %v261 = vsub.f32 %v260, %v257
        %v262 = vld [vmem:[%s215] sm:$0x1]
        %vm263 = vcmask 1041408
        %v264 = vsel %vm263, %v261, 0.0
        %v265 = vrot.slane %v264, 4
        %v266 = vadd.f32 %v264, %v265
        %v267 = vrot.slane %v266, 2
        %v268 = vadd.f32 %v266, %v267
        %v269 = vrot.slane %v268, 1
        %v270 = vadd.f32 %v268, %v269
        %v271 = vadd.f32 %v262, %v270
        %272 = vst [vmem:[%s215] sm:$0x1] %v271
        %s273 = sand.u32 %s98, 1
        %s274 = scalar_lea.sflag [#allocation4], %s273
        %s275 = sand.u32 %s98, 1
        %s276 = scalar_lea.vmem [#allocation7], %s275
        // Predicated region
        $region41: #{tpu_custom_call.1} parent=27 // pred_check
          %p277 = pneg %p108
        $region42: #{tpu_custom_call.1} parent=27 // pred_check_branch
          %279 = sbr.rel (%p277) target = $region44
        $region43: #{tpu_custom_call.1} parent=27 // pred_region
          %s281 = ssub.s32 16, 16
          %282 = vsyncadd %s274, %s281
          %s283 = smul.addr %s26, 16
          %s284 = scalar_lea.hbm %s2, %s283
          %s286 = sshll.u32 %s276, 4
          %s287 = int_to_ptr.vmem [resolvable:$true] %s286
          %289 = dma.vmem_to_hbm [thread:$0]  %s287, 16, %s284, %s274
        $region44: #{tpu_custom_call.1} parent=27 // pred_fallthru
          _
      $region28: #{tpu_custom_call.1} parent=5 // pred_fallthru
        _
      %p290 = scmp.le.s32.totalorder 2, %s17
      // Predicated region
      $region45: #{tpu_custom_call.1} parent=5 // pred_check
        %p291 = pneg %p290
      $region46: #{tpu_custom_call.1} parent=5 // pred_check_branch
        %293 = sbr.rel (%p291) target = $region48
      $region47: #{tpu_custom_call.1} parent=5 // pred_region
        %s294 = ssub.s32 %s17, 2
        // Predicated region
        $region49: #{tpu_custom_call.1} parent=47 // pred_check
          %p295 = pneg %p114
        $region50: #{tpu_custom_call.1} parent=47 // pred_check_branch
          %297 = sbr.rel (%p295) target = $region52
        $region51: #{tpu_custom_call.1} parent=47 // pred_region
          %s298 = sand.u32 %s99, 1
          %s299 = scalar_lea.sflag [#allocation4], %s298
          %s300 = sand.u32 %s99, 1
          %s301 = scalar_lea.vmem [#allocation7], %s300
          %302 = dma.done %s299, 16
        $region52: #{tpu_custom_call.1} parent=47 // pred_fallthru
          _
      $region48: #{tpu_custom_call.1} parent=5 // pred_fallthru
        _
    $region6: #{tpu_custom_call.1} parent=1 // loop_footer
      %s21 = sadd.s32 1, %s17
    $region7: #{tpu_custom_call.1} parent=1 // loop_footer_branch
      %16 = sbr.rel target = $region3
    $region8: #{tpu_custom_call.1} parent=1 // loop_exit
      _
    %303 = vsyncpa [#allocation3], 1
    %s304 = scalar_lea.sflag [#allocation3], 1
    %305 = vsyncpa %s304, 1
    %306 = vsyncpa [#allocation6], 1
    %s307 = scalar_lea.sflag [#allocation6], 1
    %308 = vsyncpa %s307, 1
    %309 = vsyncpa [#allocation4], 1
    %s310 = scalar_lea.sflag [#allocation4], 1
    %311 = vsyncpa %s310, 1

</llo_original>
